<compile_context>
chip_gen: v5e
topology: v5e:2x2
jax: 0.10.0
libtpu: 0.0.40
codegen_flags: <defaults>
</compile_context>

<pallas_src>
from collections import OrderedDict

import jax
import jax.numpy as jnp
from jax.experimental import pallas as pl
from jax.experimental.pallas import tpu as pltpu


# ----------------------------------------------------------------------------- helpers

def _round_up(x, m):
    return ((x + m - 1) // m) * m


def _pick_tile_rows(max_group):
    """Sublane-aligned row tile: small for tiny demos, 512 for large workloads
    (sized so double-buffered x/out blocks stay small even on v7x's 64 MiB VMEM)."""
    return min(512, _round_up(max(max_group, 8), 8))


# ----------------------------------------------------------------------------- kernel

def _make_mlp_kernel(n_layers, compute_dtype):
    """Fused MLP kernel: n_layers Linear layers, ReLU on all but the last.

    refs = (group_ids_smem, x_ref, w0, b0, w1, b1, ..., o_ref)
      x_ref : (TILE_ROWS, in_dim)   — one row tile of the symbol-sorted batch
      w_l   : (1, in_l, out_l)      — weights of the current row tile's symbol
      b_l   : (1, 1, out_l)         — bias (kept f32 for exact add)
      o_ref : (TILE_ROWS, out_dim)
    The scalar-prefetch group_ids ref is only consumed by the index_maps.
    """

    def kernel(*refs):
        x_ref = refs[1]
        o_ref = refs[-1]
        h = x_ref[...]
        for layer in range(n_layers):
            w = refs[2 + 2 * layer][0]                     # (in_l, out_l) compute_dtype
            b = refs[3 + 2 * layer][0]                     # (1, out_l)    f32
            h = jnp.dot(h.astype(compute_dtype), w,
                        preferred_element_type=jnp.float32) + b
            if layer < n_layers - 1:                       # ReLU after every hidden Linear
                h = jnp.maximum(h, 0.0)
        o_ref[...] = h.astype(o_ref.dtype)

    return kernel


def grouped_mlp_pallas(x_sorted, group_ids, stacked_params, tile_rows, compute_dtype):
    """Run the fused encoder+decoder MLP for all atoms in ONE pallas_call.

    x_sorted       : (N_pad, in_dim) — atoms sorted by symbol, each group padded to
                     a multiple of tile_rows
    group_ids      : (N_pad // tile_rows,) int32 — symbol index of each row tile
    stacked_params : list of (W (S, in_l, out_l) compute_dtype, b (S, 1, out_l) f32)
    returns        : (N_pad, out_dim) f32
    """
    n_pad, in_dim = x_sorted.shape
    num_tiles = n_pad // tile_rows
    n_layers = len(stacked_params)
    out_dim = stacked_params[-1][0].shape[-1]

    kernel = _make_mlp_kernel(n_layers, compute_dtype)

    in_arrays = [x_sorted]
    in_specs = [pl.BlockSpec((tile_rows, in_dim), lambda t, gid: (t, 0))]
    for w, b in stacked_params:
        in_arrays += [w, b]
        in_specs += [
            pl.BlockSpec((1,) + w.shape[1:], lambda t, gid: (gid[t], 0, 0)),
            pl.BlockSpec((1,) + b.shape[1:], lambda t, gid: (gid[t], 0, 0)),
        ]

    out_specs = pl.BlockSpec((tile_rows, out_dim), lambda t, gid: (t, 0))
    out_shape = jax.ShapeDtypeStruct((n_pad, out_dim), jnp.float32)

    return pl.pallas_call(
        kernel,
        grid_spec=pltpu.PrefetchScalarGridSpec(
            num_scalar_prefetch=1,                # group_ids -> SMEM, fed to index_maps
            grid=(num_tiles,),
            in_specs=in_specs,
            out_specs=out_specs,
        ),
        out_shape=out_shape,
        compiler_params=pltpu.CompilerParams(
            dimension_semantics=("parallel",),     # row tiles independent -> megacore OK
            vmem_limit_bytes=32 * 1024 * 1024,     # safe on v5e/v6e/v7x; blocks are small
        ),
    )(group_ids, *in_arrays)


# ------------------------------------------------------------------- parameter setup

def _xavier_uniform(key, fan_in, fan_out):
    limit = (6.0 / (fan_in + fan_out)) ** 0.5
    return jax.random.uniform(key, (fan_in, fan_out), jnp.float32, -limit, limit)


def init_autoencoder_params(key, input_dim, output_dim, hiddenlayers):
    """Per-symbol list of (W, b). Matches prepare_model topology.

    W shape (in, out) so y = x @ W + b == torch.nn.Linear(x) with W = W_torch.T
    """
    enc = list(hiddenlayers["encoder"])
    dec = list(hiddenlayers["decoder"])
    assert enc[-1] == dec[0], "encoder latent dim must equal decoder input dim"
    dims = [input_dim] + enc + dec[1:] + [output_dim]

    params = []
    for i in range(len(dims) - 1):
        key, kw, kb = jax.random.split(key, 3)
        w = _xavier_uniform(kw, dims[i], dims[i + 1])
        bound = 1.0 / (dims[i] ** 0.5)
        b = jax.random.uniform(kb, (1, dims[i + 1]), jnp.float32, -bound, bound)
        params.append((w, b))
    return params


def stack_params(per_symbol_params, symbols, compute_dtype):
    """Stack per-symbol params once: list of (W (S,in_l,out_l), b (S,1,out_l)).

    Weights cast to the compute dtype (bf16 halves weight DMA and feeds the MXU
    fast path on v5e); biases stay f32 since they are added to the f32 accumulator.
    No lane padding — block dims equal to full array dims are legal on TPU.
    """
    n_layers = len(per_symbol_params[symbols[0]])
    stacked = []
    for li in range(n_layers):
        w = jnp.stack([per_symbol_params[s][li][0] for s in symbols], axis=0)
        b = jnp.stack([per_symbol_params[s][li][1] for s in symbols], axis=0)
        stacked.append((w.astype(compute_dtype), b.astype(jnp.float32)))
    return stacked


# ------------------------------------------------------------------------ forward pass

def autoencoder_forward(X, per_symbol_params, compute_dtype=jnp.float32):
    """Reproduce AutoEncoder.forward: per-atom encode+decode, stacked in atom order.

    X                 : OrderedDict {hash: [(symbol, x_vec), ...]}, x_vec (input_dim,)
    per_symbol_params : {symbol: [(W, b), ...]}
    compute_dtype     : jnp.float32 (exact) or jnp.bfloat16 (fast MXU path, f32 accum)
    returns           : (num_atoms_total, output_dim) f32
    """
    # Flatten atoms in the exact iteration order of the torch forward.
    order = []
    for _hash, image in X.items():
        for symbol, x in image:
            order.append((symbol, x))
    assert order, "empty input"

    symbols = sorted({s for s, _ in order})
    sym_to_idx = {s: i for i, s in enumerate(symbols)}

    # Group atoms by symbol; record (group, row-in-group) per atom in output order.
    groups = {s: [] for s in symbols}
    atom_pos = []
    for sym, x in order:
        atom_pos.append((sym_to_idx[sym], len(groups[sym])))
        groups[sym].append(x)

    in_dim = int(order[0][1].shape[0])
    max_group = max(len(groups[s]) for s in symbols)
    tile_rows = _pick_tile_rows(max_group)

    # Grouped-GEMM layout: pad each group only to a multiple of tile_rows, concat.
    x_blocks, group_ids, group_base = [], [], {}
    offset = 0
    for si, sym in enumerate(symbols):
        g = jnp.stack(groups[sym], axis=0).astype(jnp.float32)      # (n_g, in_dim)
        n_g = g.shape[0]
        r_g = _round_up(n_g, tile_rows)
        x_blocks.append(jnp.pad(g, ((0, r_g - n_g), (0, 0))))
        group_ids += [si] * (r_g // tile_rows)
        group_base[si] = offset
        offset += r_g
    x_sorted = jnp.concatenate(x_blocks, axis=0).astype(compute_dtype)  # (N_pad, in_dim)
    group_ids = jnp.array(group_ids, dtype=jnp.int32)                   # (num_tiles,)

    stacked_params = stack_params(per_symbol_params, symbols, compute_dtype)

    # Single fused kernel over all row tiles (weights selected via scalar prefetch).
    y_sorted = grouped_mlp_pallas(x_sorted, group_ids, stacked_params,
                                  tile_rows, compute_dtype)             # (N_pad, out_dim)

    # Restore original torch iteration (atom) order with ONE gather.
    # Padded rows are never referenced by `perm`, so their (garbage) values are dropped.
    perm = jnp.array([group_base[si] + ri for si, ri in atom_pos], dtype=jnp.int32)
    return jnp.take(y_sorted, perm, axis=0)


# pure-JAX reference for verification
def mlp_forward_ref(x, params):
    h = x
    for li, (w, b) in enumerate(params):
        h = h @ w + b
        if li < len(params) - 1:
            h = jnp.maximum(h, 0.0)
    return h


# ------------------------------------------------------------------------------- main

if __name__ == "__main__":
    key = jax.random.PRNGKey(0)

    input_dim = 32
    output_dim = 32
    hiddenlayers = {"encoder": (16, 8), "decoder": (8, 16)}
    symbols = ["H", "O"]

    # per-symbol autoencoder parameters (deterministic)
    per_symbol_params = {}
    for s_i, sym in enumerate(symbols):
        skey = jax.random.fold_in(key, s_i)
        per_symbol_params[sym] = init_autoencoder_params(
            skey, input_dim, output_dim, hiddenlayers
        )

    # Build X = {hash: [(symbol, feature_vector), ...]} — 2 images, 3 atoms each.
    X = OrderedDict()
    atom_layout = {
        "hash0": ["H", "H", "O"],
        "hash1": ["O", "H", "O"],
    }
    k = jax.random.fold_in(key, 1234)
    for h, syms in atom_layout.items():
        image = []
        for sym in syms:
            k, sub = jax.random.split(k)
            image.append((sym, jax.random.normal(sub, (input_dim,), jnp.float32)))
        X[h] = image

    # Reference (exact torch-forward iteration order).
    ref_rows = []
    for _hash, image in X.items():
        for sym, x in image:
            ref_rows.append(mlp_forward_ref(x[None, :], per_symbol_params[sym])[0])
    ref = jnp.stack(ref_rows, axis=0)

    # 1) exact f32 path
    out_f32 = jax.block_until_ready(
        autoencoder_forward(X, per_symbol_params, compute_dtype=jnp.float32))
    assert out_f32.shape == (6, output_dim), out_f32.shape
    assert jnp.allclose(out_f32, ref, atol=1e-4, rtol=1e-4), "f32 mismatch vs reference"

    # 2) fast bf16-MXU path (f32 accumulation) — looser tolerance per bf16 precision
    out_bf16 = jax.block_until_ready(
        autoencoder_forward(X, per_symbol_params, compute_dtype=jnp.bfloat16))
    assert out_bf16.shape == (6, output_dim), out_bf16.shape
    assert jnp.allclose(out_bf16, ref, atol=5e-2, rtol=5e-2), "bf16 mismatch vs reference"

    print("KERNEL_OK")
</pallas_src>

<mosaic_0001>
module attributes {stable_mosaic.version = 11 : i64} {
  func.func @kernel(%arg0: i32, %arg1: memref<2xi32, #tpu.memory_space<smem>>, %arg2: memref<8x32xf32, #tpu.memory_space<vmem>>, %arg3: memref<1x32x16xf32, #tpu.memory_space<vmem>>, %arg4: memref<1x1x16xf32, #tpu.memory_space<vmem>>, %arg5: memref<1x16x8xf32, #tpu.memory_space<vmem>>, %arg6: memref<1x1x8xf32, #tpu.memory_space<vmem>>, %arg7: memref<1x8x16xf32, #tpu.memory_space<vmem>>, %arg8: memref<1x1x16xf32, #tpu.memory_space<vmem>>, %arg9: memref<1x16x32xf32, #tpu.memory_space<vmem>>, %arg10: memref<1x1x32xf32, #tpu.memory_space<vmem>>, %arg11: memref<8x32xf32, #tpu.memory_space<vmem>>) attributes {dimension_semantics = [#tpu.dimension_semantics<parallel>], iteration_bounds = array<i64: 2>, scalar_prefetch = 1 : i64, scratch_operands = 0 : i64, tpu.core_type = #tpu.core_type<tc>, window_params = [{transform_indices = @transform_0, window_bounds = array<i64: 8, 32>}, {transform_indices = @transform_1, window_bounds = array<i64: 1, 32, 16>}, {transform_indices = @transform_2, window_bounds = array<i64: 1, 1, 16>}, {transform_indices = @transform_3, window_bounds = array<i64: 1, 16, 8>}, {transform_indices = @transform_4, window_bounds = array<i64: 1, 1, 8>}, {transform_indices = @transform_5, window_bounds = array<i64: 1, 8, 16>}, {transform_indices = @transform_6, window_bounds = array<i64: 1, 1, 16>}, {transform_indices = @transform_7, window_bounds = array<i64: 1, 16, 32>}, {transform_indices = @transform_8, window_bounds = array<i64: 1, 1, 32>}, {transform_indices = @transform_9, window_bounds = array<i64: 8, 32>}]} {
    %c0 = arith.constant 0 : index
    %c0_0 = arith.constant 0 : index
    %0 = vector.load %arg2[%c0, %c0_0] : memref<8x32xf32, #tpu.memory_space<vmem>>, vector<8x32xf32>
    %c0_1 = arith.constant 0 : index
    %c0_2 = arith.constant 0 : index
    %c0_3 = arith.constant 0 : index
    %1 = vector.load %arg3[%c0_1, %c0_2, %c0_3] : memref<1x32x16xf32, #tpu.memory_space<vmem>>, vector<1x32x16xf32>
    %2 = vector.shape_cast %1 : vector<1x32x16xf32> to vector<32x16xf32>
    %c0_4 = arith.constant 0 : index
    %c0_5 = arith.constant 0 : index
    %c0_6 = arith.constant 0 : index
    %3 = vector.load %arg4[%c0_4, %c0_5, %c0_6] : memref<1x1x16xf32, #tpu.memory_space<vmem>>, vector<1x1x16xf32>
    %4 = vector.shape_cast %3 : vector<1x1x16xf32> to vector<1x16xf32>
    %cst = arith.constant dense<0.000000e+00> : vector<8x16xf32>
    %5 = tpu.matmul %0, %2, %cst {dimension_numbers = #tpu.dot_dimension_numbers<[1], [0], [0], [1], [0, 0, 1, 1], [], []>} : vector<8x32xf32>, vector<32x16xf32>, vector<8x16xf32> -> vector<8x16xf32>
    %6 = vector.broadcast %4 : vector<1x16xf32> to vector<8x16xf32>
    %7 = arith.addf %5, %6 : vector<8x16xf32>
    %cst_7 = arith.constant 0.000000e+00 : f32
    %8 = vector.broadcast %cst_7 : f32 to vector<8x16xf32>
    %9 = arith.maximumf %7, %8 : vector<8x16xf32>
    %c0_8 = arith.constant 0 : index
    %c0_9 = arith.constant 0 : index
    %c0_10 = arith.constant 0 : index
    %10 = vector.load %arg5[%c0_8, %c0_9, %c0_10] : memref<1x16x8xf32, #tpu.memory_space<vmem>>, vector<1x16x8xf32>
    %11 = vector.shape_cast %10 : vector<1x16x8xf32> to vector<16x8xf32>
    %c0_11 = arith.constant 0 : index
    %c0_12 = arith.constant 0 : index
    %c0_13 = arith.constant 0 : index
    %12 = vector.load %arg6[%c0_11, %c0_12, %c0_13] : memref<1x1x8xf32, #tpu.memory_space<vmem>>, vector<1x1x8xf32>
    %13 = vector.shape_cast %12 : vector<1x1x8xf32> to vector<1x8xf32>
    %cst_14 = arith.constant dense<0.000000e+00> : vector<8x8xf32>
    %14 = tpu.matmul %9, %11, %cst_14 {dimension_numbers = #tpu.dot_dimension_numbers<[1], [0], [0], [1], [0, 0, 1, 1], [], []>} : vector<8x16xf32>, vector<16x8xf32>, vector<8x8xf32> -> vector<8x8xf32>
    %15 = vector.broadcast %13 : vector<1x8xf32> to vector<8x8xf32>
    %16 = arith.addf %14, %15 : vector<8x8xf32>
    %cst_15 = arith.constant 0.000000e+00 : f32
    %17 = vector.broadcast %cst_15 : f32 to vector<8x8xf32>
    %18 = arith.maximumf %16, %17 : vector<8x8xf32>
    %c0_16 = arith.constant 0 : index
    %c0_17 = arith.constant 0 : index
    %c0_18 = arith.constant 0 : index
    %19 = vector.load %arg7[%c0_16, %c0_17, %c0_18] : memref<1x8x16xf32, #tpu.memory_space<vmem>>, vector<1x8x16xf32>
    %20 = vector.shape_cast %19 : vector<1x8x16xf32> to vector<8x16xf32>
    %c0_19 = arith.constant 0 : index
    %c0_20 = arith.constant 0 : index
    %c0_21 = arith.constant 0 : index
    %21 = vector.load %arg8[%c0_19, %c0_20, %c0_21] : memref<1x1x16xf32, #tpu.memory_space<vmem>>, vector<1x1x16xf32>
    %22 = vector.shape_cast %21 : vector<1x1x16xf32> to vector<1x16xf32>
    %cst_22 = arith.constant dense<0.000000e+00> : vector<8x16xf32>
    %23 = tpu.matmul %18, %20, %cst_22 {dimension_numbers = #tpu.dot_dimension_numbers<[1], [0], [0], [1], [0, 0, 1, 1], [], []>} : vector<8x8xf32>, vector<8x16xf32>, vector<8x16xf32> -> vector<8x16xf32>
    %24 = vector.broadcast %22 : vector<1x16xf32> to vector<8x16xf32>
    %25 = arith.addf %23, %24 : vector<8x16xf32>
    %cst_23 = arith.constant 0.000000e+00 : f32
    %26 = vector.broadcast %cst_23 : f32 to vector<8x16xf32>
    %27 = arith.maximumf %25, %26 : vector<8x16xf32>
    %c0_24 = arith.constant 0 : index
    %c0_25 = arith.constant 0 : index
    %c0_26 = arith.constant 0 : index
    %28 = vector.load %arg9[%c0_24, %c0_25, %c0_26] : memref<1x16x32xf32, #tpu.memory_space<vmem>>, vector<1x16x32xf32>
    %29 = vector.shape_cast %28 : vector<1x16x32xf32> to vector<16x32xf32>
    %c0_27 = arith.constant 0 : index
    %c0_28 = arith.constant 0 : index
    %c0_29 = arith.constant 0 : index
    %30 = vector.load %arg10[%c0_27, %c0_28, %c0_29] : memref<1x1x32xf32, #tpu.memory_space<vmem>>, vector<1x1x32xf32>
    %31 = vector.shape_cast %30 : vector<1x1x32xf32> to vector<1x32xf32>
    %cst_30 = arith.constant dense<0.000000e+00> : vector<8x32xf32>
    %32 = tpu.matmul %27, %29, %cst_30 {dimension_numbers = #tpu.dot_dimension_numbers<[1], [0], [0], [1], [0, 0, 1, 1], [], []>} : vector<8x16xf32>, vector<16x32xf32>, vector<8x32xf32> -> vector<8x32xf32>
    %33 = vector.broadcast %31 : vector<1x32xf32> to vector<8x32xf32>
    %34 = arith.addf %32, %33 : vector<8x32xf32>
    %c0_31 = arith.constant 0 : index
    %c0_32 = arith.constant 0 : index
    %35 = vector.load %arg11[%c0_31, %c0_32] : memref<8x32xf32, #tpu.memory_space<vmem>>, vector<8x32xf32>
    tpu.vector_store %arg11[%c0_31, %c0_32], %34 {strides = array<i32>} : memref<8x32xf32, #tpu.memory_space<vmem>>, vector<8x32xf32>,
    return
  }
  func.func @transform_0(%arg0: i32, %arg1: memref<2xi32, #tpu.memory_space<smem>>) -> (i32, i32) {
    %c0_i32 = arith.constant 0 : i32
    %c0_i32_0 = arith.constant 0 : i32
    return %arg0, %c0_i32 : i32, i32
  }
  func.func @transform_1(%arg0: i32, %arg1: memref<2xi32, #tpu.memory_space<smem>>) -> (i32, i32, i32) {
    %0 = arith.index_cast %arg0 : i32 to index
    %1 = memref.load %arg1[%0] : memref<2xi32, #tpu.memory_space<smem>>
    %c0_i32 = arith.constant 0 : i32
    %c0_i32_0 = arith.constant 0 : i32
    %c0_i32_1 = arith.constant 0 : i32
    return %1, %c0_i32, %c0_i32_0 : i32, i32, i32
  }
  func.func @transform_2(%arg0: i32, %arg1: memref<2xi32, #tpu.memory_space<smem>>) -> (i32, i32, i32) {
    %0 = arith.index_cast %arg0 : i32 to index
    %1 = memref.load %arg1[%0] : memref<2xi32, #tpu.memory_space<smem>>
    %c0_i32 = arith.constant 0 : i32
    %c0_i32_0 = arith.constant 0 : i32
    %c0_i32_1 = arith.constant 0 : i32
    return %1, %c0_i32, %c0_i32_0 : i32, i32, i32
  }
  func.func @transform_3(%arg0: i32, %arg1: memref<2xi32, #tpu.memory_space<smem>>) -> (i32, i32, i32) {
    %0 = arith.index_cast %arg0 : i32 to index
    %1 = memref.load %arg1[%0] : memref<2xi32, #tpu.memory_space<smem>>
    %c0_i32 = arith.constant 0 : i32
    %c0_i32_0 = arith.constant 0 : i32
    %c0_i32_1 = arith.constant 0 : i32
    return %1, %c0_i32, %c0_i32_0 : i32, i32, i32
  }
  func.func @transform_4(%arg0: i32, %arg1: memref<2xi32, #tpu.memory_space<smem>>) -> (i32, i32, i32) {
    %0 = arith.index_cast %arg0 : i32 to index
    %1 = memref.load %arg1[%0] : memref<2xi32, #tpu.memory_space<smem>>
    %c0_i32 = arith.constant 0 : i32
    %c0_i32_0 = arith.constant 0 : i32
    %c0_i32_1 = arith.constant 0 : i32
    return %1, %c0_i32, %c0_i32_0 : i32, i32, i32
  }
  func.func @transform_5(%arg0: i32, %arg1: memref<2xi32, #tpu.memory_space<smem>>) -> (i32, i32, i32) {
    %0 = arith.index_cast %arg0 : i32 to index
    %1 = memref.load %arg1[%0] : memref<2xi32, #tpu.memory_space<smem>>
    %c0_i32 = arith.constant 0 : i32
    %c0_i32_0 = arith.constant 0 : i32
    %c0_i32_1 = arith.constant 0 : i32
    return %1, %c0_i32, %c0_i32_0 : i32, i32, i32
  }
  func.func @transform_6(%arg0: i32, %arg1: memref<2xi32, #tpu.memory_space<smem>>) -> (i32, i32, i32) {
    %0 = arith.index_cast %arg0 : i32 to index
    %1 = memref.load %arg1[%0] : memref<2xi32, #tpu.memory_space<smem>>
    %c0_i32 = arith.constant 0 : i32
    %c0_i32_0 = arith.constant 0 : i32
    %c0_i32_1 = arith.constant 0 : i32
    return %1, %c0_i32, %c0_i32_0 : i32, i32, i32
  }
  func.func @transform_7(%arg0: i32, %arg1: memref<2xi32, #tpu.memory_space<smem>>) -> (i32, i32, i32) {
    %0 = arith.index_cast %arg0 : i32 to index
    %1 = memref.load %arg1[%0] : memref<2xi32, #tpu.memory_space<smem>>
    %c0_i32 = arith.constant 0 : i32
    %c0_i32_0 = arith.constant 0 : i32
    %c0_i32_1 = arith.constant 0 : i32
    return %1, %c0_i32, %c0_i32_0 : i32, i32, i32
  }
  func.func @transform_8(%arg0: i32, %arg1: memref<2xi32, #tpu.memory_space<smem>>) -> (i32, i32, i32) {
    %0 = arith.index_cast %arg0 : i32 to index
    %1 = memref.load %arg1[%0] : memref<2xi32, #tpu.memory_space<smem>>
    %c0_i32 = arith.constant 0 : i32
    %c0_i32_0 = arith.constant 0 : i32
    %c0_i32_1 = arith.constant 0 : i32
    return %1, %c0_i32, %c0_i32_0 : i32, i32, i32
  }
  func.func @transform_9(%arg0: i32, %arg1: memref<2xi32, #tpu.memory_space<smem>>) -> (i32, i32) {
    %c0_i32 = arith.constant 0 : i32
    %c0_i32_0 = arith.constant 0 : i32
    return %arg0, %c0_i32 : i32, i32
  }
}

</mosaic_0001>

<llo_original>
// kernel: tpu_custom_call.1
$region0: #{tpu_custom_call.1}
  #allocation0 [shape = 'u32[]', space=smem, size = 0x4, offset = 0x4, fixed_abs, tag = 'smem constant byte address 0x4 - core index']
  #allocation1 [shape = 'u32[72,128]{1,0:T(1,128)}', space=vmem, size = 0x9000, scoped, tag = 'internal scratch']
  #allocation2 [shape = 's32[1]{0}', space=sflag, size = 0x4, scoped, tag = 'scoped memory for tpu_custom_call.1']
  #allocation3 [shape = 'u8[512]{0}', space=smem, size = 0x200, scoped, tag = 'prefetched SMEM operand 0']
  %s0 = inlined_call_operand.vmem [shape: s32[2], index: 0, kind: input, shape index: {}]
  %s1 = inlined_call_operand.vmem [shape: f32[16,32], index: 1, kind: input, shape index: {}]
  %s2 = inlined_call_operand.vmem [shape: f32[2,32,16], index: 2, kind: input, shape index: {}]
  %s3 = inlined_call_operand.vmem [shape: f32[2,1,16], index: 3, kind: input, shape index: {}]
  %s4 = inlined_call_operand.vmem [shape: f32[2,16,8], index: 4, kind: input, shape index: {}]
  %s5 = inlined_call_operand.vmem [shape: f32[2,1,8], index: 5, kind: input, shape index: {}]
  %s6 = inlined_call_operand.vmem [shape: f32[2,8,16], index: 6, kind: input, shape index: {}]
  %s7 = inlined_call_operand.vmem [shape: f32[2,1,16], index: 7, kind: input, shape index: {}]
  %s8 = inlined_call_operand.vmem [shape: f32[2,16,32], index: 8, kind: input, shape index: {}]
  %s9 = inlined_call_operand.vmem [shape: f32[2,1,32], index: 9, kind: input, shape index: {}]
  %s10 = inlined_call_operand.hbm [shape: f32[16,32], index: 10, kind: output, shape index: {}]
  %s11 = sld [smem:[#allocation0]]
  $region69: #{tpu_custom_call.1} parent=0
    _
  %s13 = ssub.s32 1, %s11
  %s14 = scalar_select 0, %s13, %s11
  %s16 = sshll.u32 %s0, 4
  %s17 = int_to_ptr.vmem [resolvable:$true] %s16
  %19 = dma.vmem_to_smem %s17, 16, [#allocation3], [#allocation2]
  %21 = dma.done [#allocation2], 16
  %22 = sfence
  $region1: #{tpu_custom_call.1} parent=0
    #allocation4 [shape = 'u8[8192]{0}', space=vmem, size = 0x2000, scoped, tag = 'output window, operand 0']
    #allocation5 [shape = 's32[2]{0}', space=sflag, size = 0x8, scoped, tag = 'scoped memory for tpu_custom_call.1']
    %23 = vsyncpa [#allocation5], 0
    %s24 = scalar_lea.sflag [#allocation5], 1
    %25 = vsyncpa %s24, 0
    loop: start=0, step=1, limit=4
    $region2: #{tpu_custom_call.1} parent=1 // loop_pre_header
      _
    $region3: #{tpu_custom_call.1} parent=1 // loop_header
      %s27 = sphi 0, %s31
      %p28 = scmp.ge.s32.totalorder %s27, 4
      %s37 = sphi 0, %s39
      %s40 = sphi 0, %s37
      %s41 = sphi 0, %s40
      %s57 = sphi 0, %s41
      %s65 = sphi 0, %s67
      %s68 = sphi 0, %s65
      %s69 = sphi 0, %s68
      %s85 = sphi 0, %s69
      %s93 = sphi 0, %s95
      %s96 = sphi 0, %s93
      %s97 = sphi 0, %s96
      %s113 = sphi 0, %s97
      %s121 = sphi 0, %s123
      %s124 = sphi 0, %s121
      %s125 = sphi 0, %s124
      %s141 = sphi 0, %s125
      %s149 = sphi 0, %s151
      %s152 = sphi 0, %s149
      %s153 = sphi 0, %s152
      %s169 = sphi 0, %s153
      %s177 = sphi 0, %s179
      %s180 = sphi 0, %s177
      %s181 = sphi 0, %s180
      %s197 = sphi 0, %s181
      %s205 = sphi 0, %s207
      %s208 = sphi 0, %s205
      %s209 = sphi 0, %s208
      %s225 = sphi 0, %s209
      %s233 = sphi 0, %s235
      %s236 = sphi 0, %s233
      %s237 = sphi 0, %s236
      %s253 = sphi 0, %s237
      %s261 = sphi 0, %s263
      %s264 = sphi 0, %s261
      %s265 = sphi 0, %s264
      %s281 = sphi 0, %s265
      %s287 = sphi 0, %s289
      %s290 = sphi 0, %s287
      %s291 = sphi 0, %s290
      %s307 = sphi 0, %s291
    $region4: #{tpu_custom_call.1} parent=1 // loop_header_branch
      %30 = sbr.rel (%p28) target = $region8
    $region5: #{tpu_custom_call.1} parent=1 // loop_body
      %s32 = ssub.s32 %s27, 1
      %s33 = ssub.s32 %s27, 2
      %s34 = sadd.s32 %s27, 1
      %s35 = ssub.s32 %s27, %s34
      %p36 = scmp.eq.s32.totalorder %s35, 0
      %s38 = sadd.s32 %s37, 1
      %s39 = scalar_select %p36, %s37, %s38
      %p42 = pneg %p36
      %p43 = scmp.eq.s32.totalorder %s27, 1
      %p44 = por %p42, %p43
      %p45 = scmp.ne.s32.totalorder %s37, %s40
      %p46 = scmp.eq.s32.totalorder %s27, 0
      %p47 = por %p45, %p46
      %p48 = scmp.ne.s32.totalorder %s37, %s40
      %p49 = scmp.eq.s32.totalorder %s32, 1
      %p50 = por %p48, %p49
      %p51 = scmp.ne.s32.totalorder %s40, %s41
      %p52 = scmp.eq.s32.totalorder %s32, 0
      %p53 = por %p51, %p52
      %p54 = scmp.ne.s32.totalorder %s40, %s41
      %p55 = scmp.eq.s32.totalorder %s33, 1
      %p56 = por %p54, %p55
      %p58 = scmp.ne.s32.totalorder %s41, %s57
      %p59 = scmp.eq.s32.totalorder %s33, 0
      %p60 = por %p58, %p59
      %s61 = sld [smem:[#allocation3 + %s27]]
      %s62 = sld [smem:[#allocation3 + %s34]]
      %s63 = ssub.s32 %s61, %s62
      %p64 = scmp.eq.s32.totalorder %s63, 0
      %s66 = sadd.s32 %s65, 1
      %s67 = scalar_select %p64, %s65, %s66
      %p70 = pneg %p64
      %p71 = scmp.eq.s32.totalorder %s27, 1
      %p72 = por %p70, %p71
      %p73 = scmp.ne.s32.totalorder %s65, %s68
      %p74 = scmp.eq.s32.totalorder %s27, 0
      %p75 = por %p73, %p74
      %p76 = scmp.ne.s32.totalorder %s65, %s68
      %p77 = scmp.eq.s32.totalorder %s32, 1
      %p78 = por %p76, %p77
      %p79 = scmp.ne.s32.totalorder %s68, %s69
      %p80 = scmp.eq.s32.totalorder %s32, 0
      %p81 = por %p79, %p80
      %p82 = scmp.ne.s32.totalorder %s68, %s69
      %p83 = scmp.eq.s32.totalorder %s33, 1
      %p84 = por %p82, %p83
      %p86 = scmp.ne.s32.totalorder %s69, %s85
      %p87 = scmp.eq.s32.totalorder %s33, 0
      %p88 = por %p86, %p87
      %s89 = sld [smem:[#allocation3 + %s27]]
      %s90 = sld [smem:[#allocation3 + %s34]]
      %s91 = ssub.s32 %s89, %s90
      %p92 = scmp.eq.s32.totalorder %s91, 0
      %s94 = sadd.s32 %s93, 1
      %s95 = scalar_select %p92, %s93, %s94
      %p98 = pneg %p92
      %p99 = scmp.eq.s32.totalorder %s27, 1
      %p100 = por %p98, %p99
      %p101 = scmp.ne.s32.totalorder %s93, %s96
      %p102 = scmp.eq.s32.totalorder %s27, 0
      %p103 = por %p101, %p102
      %p104 = scmp.ne.s32.totalorder %s93, %s96
      %p105 = scmp.eq.s32.totalorder %s32, 1
      %p106 = por %p104, %p105
      %p107 = scmp.ne.s32.totalorder %s96, %s97
      %p108 = scmp.eq.s32.totalorder %s32, 0
      %p109 = por %p107, %p108
      %p110 = scmp.ne.s32.totalorder %s96, %s97
      %p111 = scmp.eq.s32.totalorder %s33, 1
      %p112 = por %p110, %p111
      %p114 = scmp.ne.s32.totalorder %s97, %s113
      %p115 = scmp.eq.s32.totalorder %s33, 0
      %p116 = por %p114, %p115
      %s117 = sld [smem:[#allocation3 + %s27]]
      %s118 = sld [smem:[#allocation3 + %s34]]
      %s119 = ssub.s32 %s117, %s118
      %p120 = scmp.eq.s32.totalorder %s119, 0
      %s122 = sadd.s32 %s121, 1
      %s123 = scalar_select %p120, %s121, %s122
      %p126 = pneg %p120
      %p127 = scmp.eq.s32.totalorder %s27, 1
      %p128 = por %p126, %p127
      %p129 = scmp.ne.s32.totalorder %s121, %s124
      %p130 = scmp.eq.s32.totalorder %s27, 0
      %p131 = por %p129, %p130
      %p132 = scmp.ne.s32.totalorder %s121, %s124
      %p133 = scmp.eq.s32.totalorder %s32, 1
      %p134 = por %p132, %p133
      %p135 = scmp.ne.s32.totalorder %s124, %s125
      %p136 = scmp.eq.s32.totalorder %s32, 0
      %p137 = por %p135, %p136
      %p138 = scmp.ne.s32.totalorder %s124, %s125
      %p139 = scmp.eq.s32.totalorder %s33, 1
      %p140 = por %p138, %p139
      %p142 = scmp.ne.s32.totalorder %s125, %s141
      %p143 = scmp.eq.s32.totalorder %s33, 0
      %p144 = por %p142, %p143
      %s145 = sld [smem:[#allocation3 + %s27]]
      %s146 = sld [smem:[#allocation3 + %s34]]
      %s147 = ssub.s32 %s145, %s146
      %p148 = scmp.eq.s32.totalorder %s147, 0
      %s150 = sadd.s32 %s149, 1
      %s151 = scalar_select %p148, %s149, %s150
      %p154 = pneg %p148
      %p155 = scmp.eq.s32.totalorder %s27, 1
      %p156 = por %p154, %p155
      %p157 = scmp.ne.s32.totalorder %s149, %s152
      %p158 = scmp.eq.s32.totalorder %s27, 0
      %p159 = por %p157, %p158
      %p160 = scmp.ne.s32.totalorder %s149, %s152
      %p161 = scmp.eq.s32.totalorder %s32, 1
      %p162 = por %p160, %p161
      %p163 = scmp.ne.s32.totalorder %s152, %s153
      %p164 = scmp.eq.s32.totalorder %s32, 0
      %p165 = por %p163, %p164
      %p166 = scmp.ne.s32.totalorder %s152, %s153
      %p167 = scmp.eq.s32.totalorder %s33, 1
      %p168 = por %p166, %p167
      %p170 = scmp.ne.s32.totalorder %s153, %s169
      %p171 = scmp.eq.s32.totalorder %s33, 0
      %p172 = por %p170, %p171
      %s173 = sld [smem:[#allocation3 + %s27]]
      %s174 = sld [smem:[#allocation3 + %s34]]
      %s175 = ssub.s32 %s173, %s174
      %p176 = scmp.eq.s32.totalorder %s175, 0
      %s178 = sadd.s32 %s177, 1
      %s179 = scalar_select %p176, %s177, %s178
      %p182 = pneg %p176
      %p183 = scmp.eq.s32.totalorder %s27, 1
      %p184 = por %p182, %p183
      %p185 = scmp.ne.s32.totalorder %s177, %s180
      %p186 = scmp.eq.s32.totalorder %s27, 0
      %p187 = por %p185, %p186
      %p188 = scmp.ne.s32.totalorder %s177, %s180
      %p189 = scmp.eq.s32.totalorder %s32, 1
      %p190 = por %p188, %p189
      %p191 = scmp.ne.s32.totalorder %s180, %s181
      %p192 = scmp.eq.s32.totalorder %s32, 0
      %p193 = por %p191, %p192
      %p194 = scmp.ne.s32.totalorder %s180, %s181
      %p195 = scmp.eq.s32.totalorder %s33, 1
      %p196 = por %p194, %p195
      %p198 = scmp.ne.s32.totalorder %s181, %s197
      %p199 = scmp.eq.s32.totalorder %s33, 0
      %p200 = por %p198, %p199
      %s201 = sld [smem:[#allocation3 + %s27]]
      %s202 = sld [smem:[#allocation3 + %s34]]
      %s203 = ssub.s32 %s201, %s202
      %p204 = scmp.eq.s32.totalorder %s203, 0
      %s206 = sadd.s32 %s205, 1
      %s207 = scalar_select %p204, %s205, %s206
      %p210 = pneg %p204
      %p211 = scmp.eq.s32.totalorder %s27, 1
      %p212 = por %p210, %p211
      %p213 = scmp.ne.s32.totalorder %s205, %s208
      %p214 = scmp.eq.s32.totalorder %s27, 0
      %p215 = por %p213, %p214
      %p216 = scmp.ne.s32.totalorder %s205, %s208
      %p217 = scmp.eq.s32.totalorder %s32, 1
      %p218 = por %p216, %p217
      %p219 = scmp.ne.s32.totalorder %s208, %s209
      %p220 = scmp.eq.s32.totalorder %s32, 0
      %p221 = por %p219, %p220
      %p222 = scmp.ne.s32.totalorder %s208, %s209
      %p223 = scmp.eq.s32.totalorder %s33, 1
      %p224 = por %p222, %p223
      %p226 = scmp.ne.s32.totalorder %s209, %s225
      %p227 = scmp.eq.s32.totalorder %s33, 0
      %p228 = por %p226, %p227
      %s229 = sld [smem:[#allocation3 + %s27]]
      %s230 = sld [smem:[#allocation3 + %s34]]
      %s231 = ssub.s32 %s229, %s230
      %p232 = scmp.eq.s32.totalorder %s231, 0
      %s234 = sadd.s32 %s233, 1
      %s235 = scalar_select %p232, %s233, %s234
      %p238 = pneg %p232
      %p239 = scmp.eq.s32.totalorder %s27, 1
      %p240 = por %p238, %p239
      %p241 = scmp.ne.s32.totalorder %s233, %s236
      %p242 = scmp.eq.s32.totalorder %s27, 0
      %p243 = por %p241, %p242
      %p244 = scmp.ne.s32.totalorder %s233, %s236
      %p245 = scmp.eq.s32.totalorder %s32, 1
      %p246 = por %p244, %p245
      %p247 = scmp.ne.s32.totalorder %s236, %s237
      %p248 = scmp.eq.s32.totalorder %s32, 0
      %p249 = por %p247, %p248
      %p250 = scmp.ne.s32.totalorder %s236, %s237
      %p251 = scmp.eq.s32.totalorder %s33, 1
      %p252 = por %p250, %p251
      %p254 = scmp.ne.s32.totalorder %s237, %s253
      %p255 = scmp.eq.s32.totalorder %s33, 0
      %p256 = por %p254, %p255
      %s257 = sld [smem:[#allocation3 + %s27]]
      %s258 = sld [smem:[#allocation3 + %s34]]
      %s259 = ssub.s32 %s257, %s258
      %p260 = scmp.eq.s32.totalorder %s259, 0
      %s262 = sadd.s32 %s261, 1
      %s263 = scalar_select %p260, %s261, %s262
      %p266 = pneg %p260
      %p267 = scmp.eq.s32.totalorder %s27, 1
      %p268 = por %p266, %p267
      %p269 = scmp.ne.s32.totalorder %s261, %s264
      %p270 = scmp.eq.s32.totalorder %s27, 0
      %p271 = por %p269, %p270
      %p272 = scmp.ne.s32.totalorder %s261, %s264
      %p273 = scmp.eq.s32.totalorder %s32, 1
      %p274 = por %p272, %p273
      %p275 = scmp.ne.s32.totalorder %s264, %s265
      %p276 = scmp.eq.s32.totalorder %s32, 0
      %p277 = por %p275, %p276
      %p278 = scmp.ne.s32.totalorder %s264, %s265
      %p279 = scmp.eq.s32.totalorder %s33, 1
      %p280 = por %p278, %p279
      %p282 = scmp.ne.s32.totalorder %s265, %s281
      %p283 = scmp.eq.s32.totalorder %s33, 0
      %p284 = por %p282, %p283
      %s285 = ssub.s32 %s27, %s34
      %p286 = scmp.eq.s32.totalorder %s285, 0
      %s288 = sadd.s32 %s287, 1
      %s289 = scalar_select %p286, %s287, %s288
      %p292 = pneg %p286
      %p293 = scmp.eq.s32.totalorder %s27, 1
      %p294 = por %p292, %p293
      %p295 = scmp.ne.s32.totalorder %s287, %s290
      %p296 = scmp.eq.s32.totalorder %s27, 0
      %p297 = por %p295, %p296
      %p298 = scmp.ne.s32.totalorder %s287, %s290
      %p299 = scmp.eq.s32.totalorder %s32, 1
      %p300 = por %p298, %p299
      %p301 = scmp.ne.s32.totalorder %s290, %s291
      %p302 = scmp.eq.s32.totalorder %s32, 0
      %p303 = por %p301, %p302
      %p304 = scmp.ne.s32.totalorder %s290, %s291
      %p305 = scmp.eq.s32.totalorder %s33, 1
      %p306 = por %p304, %p305
      %p308 = scmp.ne.s32.totalorder %s291, %s307
      %p309 = scmp.eq.s32.totalorder %s33, 0
      %p310 = por %p308, %p309
      %p311 = scmp.le.s32.totalorder 1, %s27
      %p312 = scmp.lt.s32.totalorder %s27, 3
      %p313 = pnand %p311, %p312
      %p314 = pneg %p313
      // Predicated region
      $region9: #{tpu_custom_call.1} parent=5 // pred_check
        _
      $region10: #{tpu_custom_call.1} parent=5 // pred_check_branch
        %316 = sbr.rel (%p313) target = $region12
      $region11: #{tpu_custom_call.1} parent=5 // pred_region
        %s317 = ssub.s32 %s27, 1
      $region12: #{tpu_custom_call.1} parent=5 // pred_fallthru
        _
      %p318 = scmp.lt.s32.totalorder %s27, 2
      // Predicated region
      $region13: #{tpu_custom_call.1} parent=5 // pred_check
        %p319 = pneg %p318
      $region14: #{tpu_custom_call.1} parent=5 // pred_check_branch
        %321 = sbr.rel (%p319) target = $region16
      $region15: #{tpu_custom_call.1} parent=5 // pred_region
        // Predicated region
        $region17: #{tpu_custom_call.1} parent=15 // pred_check
          %p322 = pneg %p47
        $region18: #{tpu_custom_call.1} parent=15 // pred_check_branch
          %324 = sbr.rel (%p322) target = $region20
        $region19: #{tpu_custom_call.1} parent=15 // pred_region
          %p325 = scmp.lt.s32.totalorder %s27, 1
          %s326 = scalar_select %p325, %s27, 1
          %s327 = smul.addr %s326, 8
          %s328 = scalar_lea.vmem %s1, %s327
        $region20: #{tpu_custom_call.1} parent=15 // pred_fallthru
          _
        // Predicated region
        $region21: #{tpu_custom_call.1} parent=15 // pred_check
          %p329 = pneg %p75
        $region22: #{tpu_custom_call.1} parent=15 // pred_check_branch
          %331 = sbr.rel (%p329) target = $region24
        $region23: #{tpu_custom_call.1} parent=15 // pred_region
          %s332 = sld [smem:[#allocation3 + %s27]]
          %p333 = scmp.lt.s32.totalorder %s332, 1
          %s334 = scalar_select %p333, %s332, 1
          %s335 = smul.addr %s334, 4
          %s336 = smul.addr %s335, 8
          %s337 = scalar_lea.vmem %s2, %s336
          %s338 = sld [smem:[#allocation3 + %s27]]
        $region24: #{tpu_custom_call.1} parent=15 // pred_fallthru
          _
        // Predicated region
        $region25: #{tpu_custom_call.1} parent=15 // pred_check
          %p339 = pneg %p103
        $region26: #{tpu_custom_call.1} parent=15 // pred_check_branch
          %341 = sbr.rel (%p339) target = $region28
        $region27: #{tpu_custom_call.1} parent=15 // pred_region
          %s342 = sld [smem:[#allocation3 + %s27]]
          %p343 = scmp.lt.s32.totalorder %s342, 1
          %s344 = scalar_select %p343, %s342, 1
          %s345 = scalar_lea.vmem %s3, %s344
          %s346 = sld [smem:[#allocation3 + %s27]]
        $region28: #{tpu_custom_call.1} parent=15 // pred_fallthru
          _
        // Predicated region
        $region29: #{tpu_custom_call.1} parent=15 // pred_check
          %p347 = pneg %p131
        $region30: #{tpu_custom_call.1} parent=15 // pred_check_branch
          %349 = sbr.rel (%p347) target = $region32
        $region31: #{tpu_custom_call.1} parent=15 // pred_region
          %s350 = sld [smem:[#allocation3 + %s27]]
          %p351 = scmp.lt.s32.totalorder %s350, 1
          %s352 = scalar_select %p351, %s350, 1
          %s353 = smul.addr %s352, 2
          %s354 = smul.addr %s353, 8
          %s355 = scalar_lea.vmem %s4, %s354
          %s356 = sld [smem:[#allocation3 + %s27]]
        $region32: #{tpu_custom_call.1} parent=15 // pred_fallthru
          _
        // Predicated region
        $region33: #{tpu_custom_call.1} parent=15 // pred_check
          %p357 = pneg %p159
        $region34: #{tpu_custom_call.1} parent=15 // pred_check_branch
          %359 = sbr.rel (%p357) target = $region36
        $region35: #{tpu_custom_call.1} parent=15 // pred_region
          %s360 = sld [smem:[#allocation3 + %s27]]
          %p361 = scmp.lt.s32.totalorder %s360, 1
          %s362 = scalar_select %p361, %s360, 1
          %s363 = scalar_lea.vmem %s5, %s362
          %s364 = sld [smem:[#allocation3 + %s27]]
        $region36: #{tpu_custom_call.1} parent=15 // pred_fallthru
          _
        // Predicated region
        $region37: #{tpu_custom_call.1} parent=15 // pred_check
          %p365 = pneg %p187
        $region38: #{tpu_custom_call.1} parent=15 // pred_check_branch
          %367 = sbr.rel (%p365) target = $region40
        $region39: #{tpu_custom_call.1} parent=15 // pred_region
          %s368 = sld [smem:[#allocation3 + %s27]]
          %p369 = scmp.lt.s32.totalorder %s368, 1
          %s370 = scalar_select %p369, %s368, 1
          %s371 = smul.addr %s370, 8
          %s372 = scalar_lea.vmem %s6, %s371
          %s373 = sld [smem:[#allocation3 + %s27]]
        $region40: #{tpu_custom_call.1} parent=15 // pred_fallthru
          _
        // Predicated region
        $region41: #{tpu_custom_call.1} parent=15 // pred_check
          %p374 = pneg %p215
        $region42: #{tpu_custom_call.1} parent=15 // pred_check_branch
          %376 = sbr.rel (%p374) target = $region44
        $region43: #{tpu_custom_call.1} parent=15 // pred_region
          %s377 = sld [smem:[#allocation3 + %s27]]
          %p378 = scmp.lt.s32.totalorder %s377, 1
          %s379 = scalar_select %p378, %s377, 1
          %s380 = scalar_lea.vmem %s7, %s379
          %s381 = sld [smem:[#allocation3 + %s27]]
        $region44: #{tpu_custom_call.1} parent=15 // pred_fallthru
          _
        // Predicated region
        $region45: #{tpu_custom_call.1} parent=15 // pred_check
          %p382 = pneg %p243
        $region46: #{tpu_custom_call.1} parent=15 // pred_check_branch
          %384 = sbr.rel (%p382) target = $region48
        $region47: #{tpu_custom_call.1} parent=15 // pred_region
          %s385 = sld [smem:[#allocation3 + %s27]]
          %p386 = scmp.lt.s32.totalorder %s385, 1
          %s387 = scalar_select %p386, %s385, 1
          %s388 = smul.addr %s387, 2
          %s389 = smul.addr %s388, 8
          %s390 = scalar_lea.vmem %s8, %s389
          %s391 = sld [smem:[#allocation3 + %s27]]
        $region48: #{tpu_custom_call.1} parent=15 // pred_fallthru
          _
        // Predicated region
        $region49: #{tpu_custom_call.1} parent=15 // pred_check
          %p392 = pneg %p271
        $region50: #{tpu_custom_call.1} parent=15 // pred_check_branch
          %394 = sbr.rel (%p392) target = $region52
        $region51: #{tpu_custom_call.1} parent=15 // pred_region
          %s395 = sld [smem:[#allocation3 + %s27]]
          %p396 = scmp.lt.s32.totalorder %s395, 1
          %s397 = scalar_select %p396, %s395, 1
          %s398 = scalar_lea.vmem %s9, %s397
          %s399 = sld [smem:[#allocation3 + %s27]]
        $region52: #{tpu_custom_call.1} parent=15 // pred_fallthru
          _
      $region16: #{tpu_custom_call.1} parent=5 // pred_fallthru
        _
      %p400 = scmp.le.s32.totalorder 1, %s27
      %p401 = scmp.lt.s32.totalorder %s27, 3
      %p402 = pnand %p400, %p401
      %p403 = pneg %p402
      // Predicated region
      $region53: #{tpu_custom_call.1} parent=5 // pred_check
        _
      $region54: #{tpu_custom_call.1} parent=5 // pred_check_branch
        %405 = sbr.rel (%p402) target = $region56
      $region55: #{tpu_custom_call.1} parent=5 // pred_region
        %s406 = ssub.s32 %s27, 1
        %p407 = scmp.lt.s32.totalorder %s32, 1
        %s408 = scalar_select %p407, %s32, 1
        %s409 = smul.addr %s408, 8
        %s410 = scalar_lea.vmem %s1, %s409
        %p411 = pneg %p53
        %p412 = pneg %p50
        %s413 = sld [smem:[#allocation3 + %s32]]
        %p414 = scmp.lt.s32.totalorder %s413, 1
        %s415 = scalar_select %p414, %s413, 1
        %s416 = smul.addr %s415, 4
        %s417 = smul.addr %s416, 8
        %s418 = scalar_lea.vmem %s2, %s417
        %p419 = pneg %p81
        %p420 = pneg %p78
        %s421 = sld [smem:[#allocation3 + %s32]]
        %p422 = scmp.lt.s32.totalorder %s421, 1
        %s423 = scalar_select %p422, %s421, 1
        %s424 = scalar_lea.vmem %s3, %s423
        %p425 = pneg %p109
        %p426 = pneg %p106
        %s427 = sld [smem:[#allocation3 + %s32]]
        %p428 = scmp.lt.s32.totalorder %s427, 1
        %s429 = scalar_select %p428, %s427, 1
        %s430 = smul.addr %s429, 2
        %s431 = smul.addr %s430, 8
        %s432 = scalar_lea.vmem %s4, %s431
        %p433 = pneg %p137
        %p434 = pneg %p134
        %s435 = sld [smem:[#allocation3 + %s32]]
        %p436 = scmp.lt.s32.totalorder %s435, 1
        %s437 = scalar_select %p436, %s435, 1
        %s438 = scalar_lea.vmem %s5, %s437
        %p439 = pneg %p165
        %p440 = pneg %p162
        %s441 = sld [smem:[#allocation3 + %s32]]
        %p442 = scmp.lt.s32.totalorder %s441, 1
        %s443 = scalar_select %p442, %s441, 1
        %s444 = smul.addr %s443, 8
        %s445 = scalar_lea.vmem %s6, %s444
        %p446 = pneg %p193
        %p447 = pneg %p190
        %s448 = sld [smem:[#allocation3 + %s32]]
        %p449 = scmp.lt.s32.totalorder %s448, 1
        %s450 = scalar_select %p449, %s448, 1
        %s451 = scalar_lea.vmem %s7, %s450
        %p452 = pneg %p221
        %p453 = pneg %p218
        %s454 = sld [smem:[#allocation3 + %s32]]
        %p455 = scmp.lt.s32.totalorder %s454, 1
        %s456 = scalar_select %p455, %s454, 1
        %s457 = smul.addr %s456, 2
        %s458 = smul.addr %s457, 8
        %s459 = scalar_lea.vmem %s8, %s458
        %p460 = pneg %p249
        %p461 = pneg %p246
        %s462 = sld [smem:[#allocation3 + %s32]]
        %p463 = scmp.lt.s32.totalorder %s462, 1
        %s464 = scalar_select %p463, %s462, 1
        %s465 = scalar_lea.vmem %s9, %s464
        %p466 = pneg %p277
        %p467 = pneg %p274
        %p468 = pneg %p303
        %p469 = pneg %p300
        %s470 = sand.u32 %s290, 1
        %s471 = scalar_lea.sflag [#allocation5], %s470
        %s472 = sand.u32 %s290, 1
        %s473 = smul.addr %s472, 8
        %s474 = scalar_lea.vmem [#allocation4], %s473
        %p475 = scmp.lt.s32.totalorder %s32, 1
        %s476 = scalar_select %p475, %s32, 1
        %s477 = smul.addr %s476, 8
        %s478 = scalar_lea.vmem %s1, %s477
        %s479 = sld [smem:[#allocation3 + %s32]]
        %p480 = scmp.lt.s32.totalorder %s479, 1
        %s481 = scalar_select %p480, %s479, 1
        %s482 = smul.addr %s481, 4
        %s483 = smul.addr %s482, 8
        %s484 = scalar_lea.vmem %s2, %s483
        %s485 = sld [smem:[#allocation3 + %s32]]
        %s486 = sld [smem:[#allocation3 + %s32]]
        %p487 = scmp.lt.s32.totalorder %s486, 1
        %s488 = scalar_select %p487, %s486, 1
        %s489 = scalar_lea.vmem %s3, %s488
        %s490 = sld [smem:[#allocation3 + %s32]]
        %s491 = sld [smem:[#allocation3 + %s32]]
        %p492 = scmp.lt.s32.totalorder %s491, 1
        %s493 = scalar_select %p492, %s491, 1
        %s494 = smul.addr %s493, 2
        %s495 = smul.addr %s494, 8
        %s496 = scalar_lea.vmem %s4, %s495
        %s497 = sld [smem:[#allocation3 + %s32]]
        %s498 = sld [smem:[#allocation3 + %s32]]
        %p499 = scmp.lt.s32.totalorder %s498, 1
        %s500 = scalar_select %p499, %s498, 1
        %s501 = scalar_lea.vmem %s5, %s500
        %s502 = sld [smem:[#allocation3 + %s32]]
        %s503 = sld [smem:[#allocation3 + %s32]]
        %p504 = scmp.lt.s32.totalorder %s503, 1
        %s505 = scalar_select %p504, %s503, 1
        %s506 = smul.addr %s505, 8
        %s507 = scalar_lea.vmem %s6, %s506
        %s508 = sld [smem:[#allocation3 + %s32]]
        %s509 = sld [smem:[#allocation3 + %s32]]
        %p510 = scmp.lt.s32.totalorder %s509, 1
        %s511 = scalar_select %p510, %s509, 1
        %s512 = scalar_lea.vmem %s7, %s511
        %s513 = sld [smem:[#allocation3 + %s32]]
        %s514 = sld [smem:[#allocation3 + %s32]]
        %p515 = scmp.lt.s32.totalorder %s514, 1
        %s516 = scalar_select %p515, %s514, 1
        %s517 = smul.addr %s516, 2
        %s518 = smul.addr %s517, 8
        %s519 = scalar_lea.vmem %s8, %s518
        %s520 = sld [smem:[#allocation3 + %s32]]
        %s521 = sld [smem:[#allocation3 + %s32]]
        %p522 = scmp.lt.s32.totalorder %s521, 1
        %s523 = scalar_select %p522, %s521, 1
        %s524 = scalar_lea.vmem %s9, %s523
        %s525 = sld [smem:[#allocation3 + %s32]]
        %v526 = vld [vmem:[%s478] sm:$0xff]
        %v527 = vld [vmem:[%s484] sm:$0xff]
        %v528 = vld [vmem:[%s484 + $0x8] sm:$0xff]
        %v529 = vld [vmem:[%s484 + $0x10] sm:$0xff]
        %v530 = vld [vmem:[%s484 + $0x18] sm:$0xff]
        %v531 = vld [vmem:[%s489] sm:$0x1]
        %v533 = vperm.slane %v531, 0
        %vm535 = vcmask 261120
        %v537 = vsel %vm535, %v526, 0
        %539 = vmatpush.msra.mxu0 0.0
        %540 = vmatpush.msra.mxu0 0.0
        %541 = vmatpush.msra.mxu0 0.0
        %542 = vmatpush.msra.mxu0 0.0
        %543 = vmatpush.msra.mxu0 0.0
        %544 = vmatpush.msra.mxu0 0.0
        %545 = vmatpush.msra.mxu0 0.0
        %546 = vmatpush.msra.mxu0 0.0
        %547 = vmatpush.msra.mxu0 0.0
        %548 = vmatpush.msra.mxu0 0.0
        %549 = vmatpush.msra.mxu0 0.0
        %550 = vmatpush.msra.mxu0 0.0
        %551 = vmatpush.msra.mxu0 %v530
        %552 = vmatpush.msra.mxu0 %v529
        %553 = vmatpush.msra.mxu0 %v528
        %554 = vmatpush.msra.mxu0 %v527
        %555 = vmatmul.f32.gmra.mxu0 %v537
        %v556 = vpop.f32.mrf.mxu0
        %v557 = vadd.f32 %v533, %v556
        %558 = vdwg.mxu0
        %v559 = vmax.f32 %v557, 0.0
        %v560 = vld [vmem:[%s496] sm:$0xff]
        %v561 = vld [vmem:[%s496 + $0x8] sm:$0xff]
        %v562 = vld [vmem:[%s501] sm:$0x1]
        %v564 = vperm.slane %v562, 0
        %vm566 = vcmask 130048
        %v568 = vsel %vm566, %v559, 0
        %570 = vmatpush.msra.mxu0 0.0
        %571 = vmatpush.msra.mxu0 0.0
        %572 = vmatpush.msra.mxu0 0.0
        %573 = vmatpush.msra.mxu0 0.0
        %574 = vmatpush.msra.mxu0 0.0
        %575 = vmatpush.msra.mxu0 0.0
        %576 = vmatpush.msra.mxu0 0.0
        %577 = vmatpush.msra.mxu0 0.0
        %578 = vmatpush.msra.mxu0 0.0
        %579 = vmatpush.msra.mxu0 0.0
        %580 = vmatpush.msra.mxu0 0.0
        %581 = vmatpush.msra.mxu0 0.0
        %582 = vmatpush.msra.mxu0 0.0
        %583 = vmatpush.msra.mxu0 0.0
        %584 = vmatpush.msra.mxu0 %v561
        %585 = vmatpush.msra.mxu0 %v560
        %586 = vmatmul.f32.gmra.mxu0 %v568
        %v587 = vpop.f32.mrf.mxu0
        %v588 = vadd.f32 %v564, %v587
        %589 = vdwg.mxu0
        %v590 = vmax.f32 %v588, 0.0
        %v591 = vld [vmem:[%s507] sm:$0xff]
        %v592 = vld [vmem:[%s512] sm:$0x1]
        %v594 = vperm.slane %v592, 0
        %vm596 = vcmask 64512
        %v598 = vsel %vm596, %v590, 0
        %600 = vmatpush.msra.mxu0 0.0
        %601 = vmatpush.msra.mxu0 0.0
        %602 = vmatpush.msra.mxu0 0.0
        %603 = vmatpush.msra.mxu0 0.0
        %604 = vmatpush.msra.mxu0 0.0
        %605 = vmatpush.msra.mxu0 0.0
        %606 = vmatpush.msra.mxu0 0.0
        %607 = vmatpush.msra.mxu0 0.0
        %608 = vmatpush.msra.mxu0 0.0
        %609 = vmatpush.msra.mxu0 0.0
        %610 = vmatpush.msra.mxu0 0.0
        %611 = vmatpush.msra.mxu0 0.0
        %612 = vmatpush.msra.mxu0 0.0
        %613 = vmatpush.msra.mxu0 0.0
        %614 = vmatpush.msra.mxu0 0.0
        %615 = vmatpush.msra.mxu0 %v591
        %616 = vmatmul.f32.gmra.mxu0 %v598
        %v617 = vpop.f32.mrf.mxu0
        %v618 = vadd.f32 %v594, %v617
        %619 = vdwg.mxu0
        %v620 = vmax.f32 %v618, 0.0
        %v621 = vld [vmem:[%s519] sm:$0xff]
        %v622 = vld [vmem:[%s519 + $0x8] sm:$0xff]
        %v623 = vld [vmem:[%s524] sm:$0x1]
        %v625 = vperm.slane %v623, 0
        %v628 = vsel %vm566, %v620, 0
        %630 = vmatpush.msra.mxu0 0.0
        %631 = vmatpush.msra.mxu0 0.0
        %632 = vmatpush.msra.mxu0 0.0
        %633 = vmatpush.msra.mxu0 0.0
        %634 = vmatpush.msra.mxu0 0.0
        %635 = vmatpush.msra.mxu0 0.0
        %636 = vmatpush.msra.mxu0 0.0
        %637 = vmatpush.msra.mxu0 0.0
        %638 = vmatpush.msra.mxu0 0.0
        %639 = vmatpush.msra.mxu0 0.0
        %640 = vmatpush.msra.mxu0 0.0
        %641 = vmatpush.msra.mxu0 0.0
        %642 = vmatpush.msra.mxu0 0.0
        %643 = vmatpush.msra.mxu0 0.0
        %644 = vmatpush.msra.mxu0 %v622
        %645 = vmatpush.msra.mxu0 %v621
        %646 = vmatmul.f32.gmra.mxu0 %v628
        %v647 = vpop.f32.mrf.mxu0
        %v648 = vadd.f32 %v625, %v647
        %649 = vdwg.mxu0
        %650 = vst.msk [vmem:[%s474] sm:$0xff] %vm535, %v648
        %s651 = sand.u32 %s290, 1
        %s652 = scalar_lea.sflag [#allocation5], %s651
        %s653 = sand.u32 %s290, 1
        %s654 = smul.addr %s653, 8
        %s655 = scalar_lea.vmem [#allocation4], %s654
        // Predicated region
        $region57: #{tpu_custom_call.1} parent=55 // pred_check
          %p656 = pneg %p300
        $region58: #{tpu_custom_call.1} parent=55 // pred_check_branch
          %658 = sbr.rel (%p656) target = $region60
        $region59: #{tpu_custom_call.1} parent=55 // pred_region
          %660 = vsyncadd %s652, 0
          %s661 = smul.addr %s32, 8
          %s662 = scalar_lea.hbm %s10, %s661
          %s664 = sshll.u32 %s655, 4
          %s665 = int_to_ptr.vmem [resolvable:$true] %s664
          %s666 = sshll.u32 %s662, 4
          %s667 = int_to_ptr.hbm [resolvable:$true] %s666
          %669 = dma.vmem_to_hbm [thread:$0]  %s665, 128, %s667, %s652
        $region60: #{tpu_custom_call.1} parent=55 // pred_fallthru
          _
      $region56: #{tpu_custom_call.1} parent=5 // pred_fallthru
        _
      %p670 = scmp.le.s32.totalorder 2, %s27
      // Predicated region
      $region61: #{tpu_custom_call.1} parent=5 // pred_check
        %p671 = pneg %p670
      $region62: #{tpu_custom_call.1} parent=5 // pred_check_branch
        %673 = sbr.rel (%p671) target = $region64
      $region63: #{tpu_custom_call.1} parent=5 // pred_region
        %s674 = ssub.s32 %s27, 2
        // Predicated region
        $region65: #{tpu_custom_call.1} parent=63 // pred_check
          %p675 = pneg %p306
        $region66: #{tpu_custom_call.1} parent=63 // pred_check_branch
          %677 = sbr.rel (%p675) target = $region68
        $region67: #{tpu_custom_call.1} parent=63 // pred_region
          %s678 = sand.u32 %s291, 1
          %s679 = scalar_lea.sflag [#allocation5], %s678
          %s680 = sand.u32 %s291, 1
          %s681 = smul.addr %s680, 8
          %s682 = scalar_lea.vmem [#allocation4], %s681
          %684 = dma.done %s679, 128
        $region68: #{tpu_custom_call.1} parent=63 // pred_fallthru
          _
      $region64: #{tpu_custom_call.1} parent=5 // pred_fallthru
        _
    $region6: #{tpu_custom_call.1} parent=1 // loop_footer
      %s31 = sadd.s32 1, %s27
    $region7: #{tpu_custom_call.1} parent=1 // loop_footer_branch
      %26 = sbr.rel target = $region3
    $region8: #{tpu_custom_call.1} parent=1 // loop_exit
      _
    %685 = vsyncpa [#allocation5], 1
    %s686 = scalar_lea.sflag [#allocation5], 1
    %687 = vsyncpa %s686, 1

</llo_original>
